<compile_context>
chip_gen: v7x
topology: tpu7x:2x2x1
jax: 0.10.0
libtpu: 0.0.40
codegen_flags: <defaults>
</compile_context>

<pallas_src>
import jax
import jax.numpy as jnp
from jax.experimental import pallas as pl
from jax.experimental.pallas import tpu as pltpu

VOCAB = 10
EMB_DIM = 12
HID = 16
OUT = 8
VOCAB_PAD = 16  # sublane-friendly padding of the vocab axis


def _fwd_kernel(idx_ref, wt_ref, y_ref):
    # idx_ref: (1, N_blk) int32            token ids, lane-packed
    # wt_ref : (OUT, VOCAB_PAD) f32        folded weights, transposed, vocab-padded
    # y_ref  : (OUT, N_blk) f32            transposed output (lane-dense)
    idx = idx_ref[...]                                                # (1, N_blk)
    n_blk = idx.shape[1]

    # One-hot gather expressed as a single small MXU matmul:
    #   onehot[v, t] = (v == idx[t]);  y.T = W.T @ onehot
    vocab_iota = jax.lax.broadcasted_iota(jnp.int32, (VOCAB_PAD, n_blk), 0)
    onehot = (vocab_iota == idx).astype(jnp.float32)                  # (VOCAB_PAD, N_blk)

    y_ref[...] = jnp.dot(wt_ref[...], onehot,
                         preferred_element_type=jnp.float32)          # (OUT, N_blk)


def dummy_model_forward(x, emb_w, w1, w2):
    """x: (B, S) int32 token ids. Returns (y1, y2), each (B, S, OUT) f32.

    On a single device the parallel weights == master weights, so y1 == y2;
    the shared hot path is computed once.
    """
    b, s = x.shape
    n = b * s

    # Fold the linear chain: (VOCAB, OUT) lookup table, transposed + vocab-padded.
    w_folded = emb_w @ w1.T @ w2.T                                    # (VOCAB, OUT)
    wt = jnp.zeros((OUT, VOCAB_PAD), jnp.float32).at[:, :VOCAB].set(w_folded.T)

    # Token-tile sizing: multiple of 128 lanes; cap at 1024 so double-buffered
    # tiles stay far under the 64 MiB v7x VMEM budget.
    if n > 1024:
        n_blk = 1024
    else:
        n_blk = max(128, ((n + 127) // 128) * 128)
    n_pad = ((n + n_blk - 1) // n_blk) * n_blk

    # Pad with a valid id (0); padded columns are sliced off below.
    idx = jnp.pad(x.reshape(1, n).astype(jnp.int32), ((0, 0), (0, n_pad - n)))

    grid = (n_pad // n_blk,)
    y_t = pl.pallas_call(
        _fwd_kernel,
        out_shape=jax.ShapeDtypeStruct((OUT, n_pad), jnp.float32),
        grid=grid,
        in_specs=[
            pl.BlockSpec((1, n_blk), lambda i: (0, i)),          # token-id tile
            pl.BlockSpec((OUT, VOCAB_PAD), lambda i: (0, 0)),    # folded weights (resident)
        ],
        out_specs=pl.BlockSpec((OUT, n_blk), lambda i: (0, i)),
        compiler_params=pltpu.CompilerParams(
            dimension_semantics=("parallel",)),
    )(idx, wt)

    # Cheap XLA plumbing on a tiny array: drop padding, transpose back, reshape.
    y = y_t[:, :n].T.reshape(b, s, OUT)
    return y, y


def _init_params():
    k_emb, k1, k2 = jax.random.split(jax.random.PRNGKey(42), 3)
    emb_w = jax.random.normal(k_emb, (VOCAB, EMB_DIM), jnp.float32)   # nn.Embedding(10, 12)
    w1 = jax.random.normal(k1, (HID, EMB_DIM), jnp.float32) * 0.1     # Linear(12, 16, bias=False)
    w2 = jax.random.normal(k2, (OUT, HID), jnp.float32) * 0.1         # Linear(16, 8, bias=False)
    return emb_w, w1, w2


if __name__ == "__main__":
    B, S = 2, 8
    emb_w, w1, w2 = _init_params()
    x = jax.random.randint(jax.random.PRNGKey(0), (B, S), 0, VOCAB, jnp.int32)

    fwd = jax.jit(dummy_model_forward)
    y1, y2 = fwd(x, emb_w, w1, w2)
    jax.block_until_ready((y1, y2))

    # Pure-JAX reference of the same semantics.
    ref = jnp.take(emb_w, x, axis=0) @ w1.T @ w2.T
    assert y1.shape == (B, S, OUT) and y2.shape == (B, S, OUT)
    assert jnp.allclose(y1, ref, atol=1e-5), "y1 mismatch"
    assert jnp.allclose(y2, ref, atol=1e-5), "y2 mismatch"

    # TODO(synk): out-of-range token ids produce zero rows (PyTorch would raise).
    print("KERNEL_OK")
</pallas_src>

<mosaic_0001>
module attributes {stable_mosaic.version = 11 : i64} {
  func.func @_fwd_kernel(%arg0: i32, %arg1: memref<1x128xi32, #tpu.memory_space<vmem>>, %arg2: memref<8x16xf32, #tpu.memory_space<vmem>>, %arg3: memref<8x128xf32, #tpu.memory_space<vmem>>) attributes {dimension_semantics = [#tpu.dimension_semantics<parallel>], iteration_bounds = array<i64: 1>, scalar_prefetch = 0 : i64, scratch_operands = 0 : i64, tpu.core_type = #tpu.core_type<tc>, window_params = [{transform_indices = @transform_0, window_bounds = array<i64: 1, 128>}, {pipeline_mode = #tpu.pipeline_mode<synchronous>, transform_indices = @transform_1, window_bounds = array<i64: 8, 16>}, {transform_indices = @transform_2, window_bounds = array<i64: 8, 128>}]} {
    %c0 = arith.constant 0 : index
    %c0_0 = arith.constant 0 : index
    %0 = vector.load %arg1[%c0, %c0_0] : memref<1x128xi32, #tpu.memory_space<vmem>>, vector<1x128xi32>
    %1 = tpu.iota {dimensions = array<i32: 0>} : vector<16x128xi32>
    %2 = vector.broadcast %0 : vector<1x128xi32> to vector<16x128xi32>
    %3 = arith.cmpi eq, %1, %2 : vector<16x128xi32>
    %4 = arith.extui %3 : vector<16x128xi1> to vector<16x128xi32>
    %5 = arith.sitofp %4 : vector<16x128xi32> to vector<16x128xf32>
    %c0_1 = arith.constant 0 : index
    %c0_2 = arith.constant 0 : index
    %6 = vector.load %arg2[%c0_1, %c0_2] : memref<8x16xf32, #tpu.memory_space<vmem>>, vector<8x16xf32>
    %cst = arith.constant dense<0.000000e+00> : vector<8x128xf32>
    %7 = tpu.matmul %6, %5, %cst {dimension_numbers = #tpu.dot_dimension_numbers<[1], [0], [0], [1], [0, 0, 1, 1], [], []>} : vector<8x16xf32>, vector<16x128xf32>, vector<8x128xf32> -> vector<8x128xf32>
    %c0_3 = arith.constant 0 : index
    %c0_4 = arith.constant 0 : index
    %8 = vector.load %arg3[%c0_3, %c0_4] : memref<8x128xf32, #tpu.memory_space<vmem>>, vector<8x128xf32>
    tpu.vector_store %arg3[%c0_3, %c0_4], %7 {strides = array<i32>} : memref<8x128xf32, #tpu.memory_space<vmem>>, vector<8x128xf32>,
    return
  }
  func.func @transform_0(%arg0: i32) -> (i32, i32) {
    %c0_i32 = arith.constant 0 : i32
    %c0_i32_0 = arith.constant 0 : i32
    return %c0_i32, %arg0 : i32, i32
  }
  func.func @transform_1(%arg0: i32) -> (i32, i32) {
    %c0_i32 = arith.constant 0 : i32
    %c0_i32_0 = arith.constant 0 : i32
    %c0_i32_1 = arith.constant 0 : i32
    return %c0_i32, %c0_i32_0 : i32, i32
  }
  func.func @transform_2(%arg0: i32) -> (i32, i32) {
    %c0_i32 = arith.constant 0 : i32
    %c0_i32_0 = arith.constant 0 : i32
    return %c0_i32, %arg0 : i32, i32
  }
}

</mosaic_0001>

<llo_original>
// kernel: dummy_model_forward.1
$region0: #{dummy_model_forward.1}
  #allocation0 [shape = 'u32[]', space=smem, size = 0x4, offset = 0x4, fixed_abs, tag = 'smem constant byte address 0x4 - core index']
  #allocation1 [shape = 'u32[144,128]{1,0:T(1,128)}', space=vmem, size = 0x12000, scoped, tag = 'internal scratch']
  %s0 = inlined_call_operand.vmem [shape: s32[1,128], index: 0, kind: input, shape index: {}]
  %s1 = inlined_call_operand.vmem [shape: f32[8,16], index: 1, kind: input, shape index: {}]
  %s2 = inlined_call_operand.vmem [shape: f32[8,128], index: 2, kind: output, shape index: {}]
  %s3 = sld [smem:[#allocation0]]
  $region18: #{dummy_model_forward.1} parent=0
    _
  %s5 = ssub.s32 1, %s3
  %s6 = scalar_select 0, %s5, %s3
  // Predicated region
  $region2: #{dummy_model_forward.1} parent=0 // pred_check
    _
  $region3: #{dummy_model_forward.1} parent=0 // pred_check_branch
    %8 = sbr.rel (0) target = $region5
  $region4: #{dummy_model_forward.1} parent=0 // pred_region
    _
  $region5: #{dummy_model_forward.1} parent=0 // pred_fallthru
    _
  // Predicated region
  $region6: #{dummy_model_forward.1} parent=0 // pred_check
    _
  $region7: #{dummy_model_forward.1} parent=0 // pred_check_branch
    %10 = sbr.rel (0) target = $region9
  $region8: #{dummy_model_forward.1} parent=0 // pred_region
    _
  $region9: #{dummy_model_forward.1} parent=0 // pred_fallthru
    _
  %v11 = vld [vmem:[%s0] sm:$0x1]
  %v12 = vlaneseq
  %v13 = vshrl.u32 %v12, 7
  %v14 = vadd.s32 %v13, 8
  %v15 = vlaneseq
  %v16 = vshrl.u32 %v15, 7
  %v17 = vsub.s32 0, %v16
  %v18 = vrot.slane %v11, %v17
  %vm19 = vcmp.eq.s32.totalorder %v13, %v18
  %vm20 = vcmp.eq.s32.totalorder %v14, %v18
  %v21 = vsel %vm19, 1, 0
  %v22 = vsel %vm20, 1, 0
  %v23 = vcvt.s32.f32 %v21
  %v24 = vcvt.s32.f32 %v22
  %v25 = vld [vmem:[%s1] sm:$0xff]
  %vm26 = vcmask 130048
  %v28 = vsel %vm26, %v25, 0
  %30 = vmatprep.subr.mxu0 0.0
  %31 = vmatpush1.msra.mxu0 %v23
  %32 = vmatprep.subr.mxu0 0.0
  %33 = vmatpush1.msra.mxu0 %v24
  %34 = vmatprep.subr.mxu0 0.0
  %35 = vmatpush1.msra.mxu0 0.0
  %36 = vmatprep.subr.mxu0 0.0
  %37 = vmatpush1.msra.mxu0 0.0
  %38 = vmatprep.subr.mxu0 0.0
  %39 = vmatpush1.msra.mxu0 0.0
  %40 = vmatprep.subr.mxu0 0.0
  %41 = vmatpush1.msra.mxu0 0.0
  %42 = vmatprep.subr.mxu0 0.0
  %43 = vmatpush1.msra.mxu0 0.0
  %44 = vmatprep.subr.mxu0 0.0
  %45 = vmatpush1.msra.mxu0 0.0
  %46 = vmatprep.subr.mxu0 0.0
  %47 = vmatpush1.msra.mxu0 0.0
  %48 = vmatprep.subr.mxu0 0.0
  %49 = vmatpush1.msra.mxu0 0.0
  %50 = vmatprep.subr.mxu0 0.0
  %51 = vmatpush1.msra.mxu0 0.0
  %52 = vmatprep.subr.mxu0 0.0
  %53 = vmatpush1.msra.mxu0 0.0
  %54 = vmatprep.subr.mxu0 0.0
  %55 = vmatpush1.msra.mxu0 0.0
  %56 = vmatprep.subr.mxu0 0.0
  %57 = vmatpush1.msra.mxu0 0.0
  %58 = vmatprep.subr.mxu0 0.0
  %59 = vmatpush1.msra.mxu0 0.0
  %60 = vmatprep.subr.mxu0 0.0
  %61 = vmatpush1.msra.mxu0 0.0
  %62 = vmatprep.subr.mxu0 0.0
  %63 = vmatpush1.msra.mxu0 0.0
  %64 = vmatprep.subr.mxu0 0.0
  %65 = vmatpush1.msra.mxu0 0.0
  %66 = vmatprep.subr.mxu0 0.0
  %67 = vmatpush1.msra.mxu0 0.0
  %68 = vmatprep.subr.mxu0 0.0
  %69 = vmatpush1.msra.mxu0 0.0
  %70 = vmatprep.subr.mxu0 0.0
  %71 = vmatpush1.msra.mxu0 0.0
  %72 = vmatprep.subr.mxu0 0.0
  %73 = vmatpush1.msra.mxu0 0.0
  %74 = vmatprep.subr.mxu0 0.0
  %75 = vmatpush1.msra.mxu0 0.0
  %76 = vmatprep.subr.mxu0 0.0
  %77 = vmatpush1.msra.mxu0 0.0
  %78 = vmatprep.subr.mxu0 0.0
  %79 = vmatpush1.msra.mxu0 0.0
  %80 = vmatprep.subr.mxu0 0.0
  %81 = vmatpush1.msra.mxu0 0.0
  %82 = vmatprep.subr.mxu0 0.0
  %83 = vmatpush1.msra.mxu0 0.0
  %84 = vmatprep.subr.mxu0 0.0
  %85 = vmatpush1.msra.mxu0 0.0
  %86 = vmatprep.subr.mxu0 0.0
  %87 = vmatpush1.msra.mxu0 0.0
  %88 = vmatprep.subr.mxu0 0.0
  %89 = vmatpush1.msra.mxu0 0.0
  %90 = vmatprep.subr.mxu0 0.0
  %91 = vmatpush1.msra.mxu0 0.0
  %92 = vmatprep.subr.mxu0 0.0
  %93 = vmatpush1.msra.mxu0 0.0
  %94 = vmatprep.mubr.f32.mxu0 0.0
  %95 = vmatmul.mubr.f32.gmra.mrb[0].mxu0 %v28
  %v96 = vpop.f32.mrb[0].mxu0
  %v97 = vadd.f32 0.0, %v96
  %v98 = vpop.f32.mrb[0].mxu0
  %99 = vdwg.mxu0
  %100 = vst [vmem:[%s2] sm:$0xff] %v97
  // Predicated region
  $region10: #{dummy_model_forward.1} parent=0 // pred_check
    _
  $region11: #{dummy_model_forward.1} parent=0 // pred_check_branch
    %102 = sbr.rel (0) target = $region13
  $region12: #{dummy_model_forward.1} parent=0 // pred_region
    _
  $region13: #{dummy_model_forward.1} parent=0 // pred_fallthru
    _
  // Predicated region
  $region14: #{dummy_model_forward.1} parent=0 // pred_check
    _
  $region15: #{dummy_model_forward.1} parent=0 // pred_check_branch
    %104 = sbr.rel (0) target = $region17
  $region16: #{dummy_model_forward.1} parent=0 // pred_region
    _
  $region17: #{dummy_model_forward.1} parent=0 // pred_fallthru
    _

</llo_original>
